<compile_context>
chip_gen: v6e
topology: v6e:2x2x1
jax: 0.10.0
libtpu: 0.0.40
codegen_flags: <defaults>
</compile_context>

<pallas_src>
import functools
import numpy as np
import jax
import jax.numpy as jnp
from jax.experimental import pallas as pl
from jax.experimental.pallas import tpu as pltpu


def _round_up(x, m):
    return (x + m - 1) // m * m


# ---------------------------------------------------------------------------
# Fused kernel: per-graph projection (MXU) + token-sequence assembly.
# grid = (num_graphs_pad // g_b,), each step handles g_b graphs.
# Sequence layout per graph: [graph_token | max_node node slots | max_edge
# edge slots].
# ---------------------------------------------------------------------------
def _tokenize_kernel(gt_ref, wv_ref, we_ref,
                     xv_ref, xe_ref,
                     tok_ref,
                     *, g_b, max_node, max_edge, max_node_pad, max_edge_pad):
    # Fused projections: one MXU matmul covers all g_b graphs' rows.  The
    # bias lives in the last row of wv_ref / we_ref and is picked up by the
    # indicator column of xv_ref / xe_ref, so pad rows project to exact 0.
    # (Casting to bf16 with f32 accumulation would raise MXU throughput on
    # v6e/v7x; kept f32 to match the PyTorch module numerics.)
    yv = jnp.dot(xv_ref[...], wv_ref[...], preferred_element_type=jnp.float32)
    ye = jnp.dot(xe_ref[...], we_ref[...], preferred_element_type=jnp.float32)

    gt = gt_ref[...]                                            # (1, H)

    for g in range(g_b):                    # static unroll, g_b is small
        # Direct slice stores (no concat copy): [graph | nodes | edges].
        tok_ref[g, 0:1, :] = gt
        tok_ref[g, 1:1 + max_node, :] = (
            yv[g * max_node_pad:g * max_node_pad + max_node])
        tok_ref[g, 1 + max_node:1 + max_node + max_edge, :] = (
            ye[g * max_edge_pad:g * max_edge_pad + max_edge])


def _scatter_dense(feat, seg_ids, counts, rows_per_seg, num_segs_pad):
    """Scatter row-features into a dense (num_segs_pad*rows_per_seg, K) layout,
    zero-padded to rows_per_seg rows per segment.  Pure-JAX layout plumbing so
    the Pallas kernel reads sublane-aligned per-graph tiles.  Assumes rows are
    sorted by segment (standard PyG batching)."""
    ptr = jnp.concatenate(
        [jnp.zeros((1,), jnp.int32), jnp.cumsum(counts).astype(jnp.int32)[:-1]])
    local = jnp.arange(feat.shape[0], dtype=jnp.int32) - ptr[seg_ids]
    dense = jnp.zeros((num_segs_pad * rows_per_seg, feat.shape[1]), feat.dtype)
    return dense.at[seg_ids * rows_per_seg + local].set(feat)


def graph_feature_tokenizer_pallas(X_v, X_e, batch, edge_batch,
                                   node_cnt, edge_cnt,
                                   graph_token, w_in, b_in, we_in, be_in,
                                   max_node, max_edge,
                                   graphs_per_block=None):
    num_graphs = int(node_cnt.shape[0])
    hidden = w_in.shape[1]
    seq_len = 1 + max_node + max_edge
    if graphs_per_block is None:
        graphs_per_block = min(8, num_graphs)    # amortize per-step overhead
    g_b = graphs_per_block
    num_graphs_pad = _round_up(num_graphs, g_b)
    max_node_pad = _round_up(max_node, 8)        # sublane-aligned input tiles
    max_edge_pad = _round_up(max_edge, 8)

    # Fold the bias into the weights: append an indicator column (1 for real
    # rows) to the features and the bias as an extra weight row.  Valid rows
    # then compute x @ W + b exactly; zero pad rows project to exact zero, so
    # no post-projection masking is needed in the kernel.
    xv_aug = jnp.concatenate(
        [X_v, jnp.ones((X_v.shape[0], 1), X_v.dtype)], axis=1)
    xe_aug = jnp.concatenate(
        [X_e, jnp.ones((X_e.shape[0], 1), X_e.dtype)], axis=1)
    wv_aug = jnp.concatenate([w_in, b_in.reshape(1, hidden)], axis=0)
    we_aug = jnp.concatenate([we_in, be_in.reshape(1, hidden)], axis=0)

    # Dense, aligned per-graph input layout (wrapper-side layout plumbing).
    xv_dense = _scatter_dense(xv_aug, batch, node_cnt, max_node_pad,
                              num_graphs_pad)
    xe_dense = _scatter_dense(xe_aug, edge_batch, edge_cnt, max_edge_pad,
                              num_graphs_pad)

    kernel = functools.partial(
        _tokenize_kernel, g_b=g_b, max_node=max_node, max_edge=max_edge,
        max_node_pad=max_node_pad, max_edge_pad=max_edge_pad)

    grid_spec = pltpu.PrefetchScalarGridSpec(
        num_scalar_prefetch=0,
        grid=(num_graphs_pad // g_b,),
        in_specs=[
            pl.BlockSpec((1, hidden), lambda i: (0, 0)),            # graph tok
            pl.BlockSpec(wv_aug.shape, lambda i: (0, 0)),           # w_in|b_in
            pl.BlockSpec(we_aug.shape, lambda i: (0, 0)),           # we_in|be_in
            pl.BlockSpec((g_b * max_node_pad, xv_dense.shape[1]),
                         lambda i: (i, 0)),                         # node feats
            pl.BlockSpec((g_b * max_edge_pad, xe_dense.shape[1]),
                         lambda i: (i, 0)),                         # edge feats
        ],
        out_specs=pl.BlockSpec((g_b, seq_len, hidden),
                               lambda i: (i, 0, 0)),
    )

    tokens_pad = pl.pallas_call(
        kernel,
        grid_spec=grid_spec,
        out_shape=jax.ShapeDtypeStruct(
            (num_graphs_pad, seq_len, hidden), jnp.float32),
        compiler_params=pltpu.CompilerParams(
            dimension_semantics=("parallel",)),
    )(graph_token, wv_aug, we_aug, xv_dense, xe_dense)

    tokens = tokens_pad[:num_graphs]

    # Attention mask: trivial iota/compare on counts — plain JAX so XLA fuses
    # it downstream (removes a tiny lane-masked int32 output per grid step).
    seq_ids = jnp.arange(seq_len, dtype=jnp.int32)[None, :]
    attn_mask = ((seq_ids == 0)
                 | ((seq_ids >= 1) & (seq_ids < 1 + node_cnt[:, None]))
                 | ((seq_ids >= 1 + max_node)
                    & (seq_ids < 1 + max_node + edge_cnt[:, None])))
    return tokens, attn_mask


if __name__ == "__main__":
    key = jax.random.PRNGKey(0)

    # ----------------- module config (small) ------------------------------
    input_feat_dim = 8
    input_edge_dim = 6
    hidden_dim = 32
    d_p = 4
    d_e = 4
    method = "orf"           # only 'orf' path implemented
    use_graph_token = True

    # ----------------- synthetic PyG-style batch of 2 graphs --------------
    node_counts = [5, 7]
    num_graphs = len(node_counts)
    num_nodes = sum(node_counts)
    batch = jnp.asarray(np.repeat(np.arange(num_graphs), node_counts), jnp.int32)

    edges_g0 = [(0, 1), (1, 2), (2, 3), (3, 4), (4, 0), (1, 3), (2, 0), (3, 1)]
    edges_g1 = [(5, 6), (6, 7), (7, 8), (8, 9), (9, 10), (10, 11), (11, 5),
                (6, 9), (7, 10), (8, 5)]
    edge_counts = [len(edges_g0), len(edges_g1)]
    edge_index = jnp.asarray(np.array(edges_g0 + edges_g1, dtype=np.int32).T)
    num_edges = edge_index.shape[1]

    key, kx, ke = jax.random.split(key, 3)
    x = jax.random.normal(kx, (num_nodes, input_feat_dim), jnp.float32)
    edge_attr = jax.random.normal(ke, (num_edges, input_edge_dim), jnp.float32)

    # ----------------- parameters (Xavier uniform, deterministic) ---------
    def xavier(k, shape, fan_in, fan_out):
        bound = float(np.sqrt(6.0 / (fan_in + fan_out)))
        return jax.random.uniform(k, shape, jnp.float32, -bound, bound)

    input_dim = input_feat_dim + 2 * d_p + d_e
    input_edge_dim_full = input_edge_dim + 2 * d_p + d_e
    key, k1, k2, k3, k4, k5 = jax.random.split(key, 6)
    E_V = xavier(k1, (1, d_e), d_e, 1)
    E_E = xavier(k2, (1, d_e), d_e, 1)
    # weights stored (in, out) so the kernel computes X @ W + b (== torch Linear)
    w_in = xavier(k3, (input_dim, hidden_dim), input_dim, hidden_dim)
    b_in = jnp.zeros((hidden_dim,), jnp.float32)
    we_in = xavier(k4, (input_edge_dim_full, hidden_dim),
                   input_edge_dim_full, hidden_dim)
    be_in = jnp.zeros((hidden_dim,), jnp.float32)
    graph_token = xavier(k5, (1, hidden_dim), hidden_dim, 1)

    # ----------------- node identifiers (ORF) -----------------------------
    # TODO(synk): QR / randperm for ORF (and eigh for 'laplacian') have no
    # clean Pallas equivalent; they run as plain JAX (XLA) glue here.
    P_list = []
    for n_i in node_counts:
        key, kg, kp = jax.random.split(key, 3)
        G = jax.random.normal(kg, (n_i, n_i), jnp.float32)
        Q, _ = jnp.linalg.qr(G)
        if n_i < d_p:
            Q = jnp.pad(Q, ((0, 0), (0, d_p - n_i)))
        elif n_i > d_p:
            perm = jax.random.permutation(kp, n_i)
            Q = Q[:, perm[:d_p]]
        P_list.append(Q)
    P = jnp.concatenate(P_list, axis=0)                       # (num_nodes, d_p)

    # ----------------- build concatenated features (glue) -----------------
    X_v = jnp.concatenate(
        [x, P, P, jnp.broadcast_to(E_V, (num_nodes, d_e))], axis=1)
    src, dst = edge_index[0], edge_index[1]
    X_e = jnp.concatenate(
        [edge_attr, P[src], P[dst], jnp.broadcast_to(E_E, (num_edges, d_e))],
        axis=1)
    edge_batch = batch[src]

    node_cnt = jnp.asarray(node_counts, jnp.int32)
    edge_cnt = jnp.asarray(edge_counts, jnp.int32)
    max_node = max(node_counts)
    max_edge = max(edge_counts)

    # ----------------- Pallas: fused projection + token assembly ----------
    tokens, attn_mask = graph_feature_tokenizer_pallas(
        X_v, X_e, batch, edge_batch, node_cnt, edge_cnt,
        graph_token, w_in, b_in, we_in, be_in, max_node, max_edge)
    tokens = jax.block_until_ready(tokens)
    attn_mask = jax.block_until_ready(attn_mask)

    # ----------------- pure-JAX / numpy reference check -------------------
    Xv_proj_ref = np.asarray(X_v) @ np.asarray(w_in) + np.asarray(b_in)
    Xe_proj_ref = np.asarray(X_e) @ np.asarray(we_in) + np.asarray(be_in)
    seq_len = 1 + max_node + max_edge
    tok_ref = np.zeros((num_graphs, seq_len, hidden_dim), np.float32)
    msk_ref = np.zeros((num_graphs, seq_len), bool)
    nptr = np.concatenate([[0], np.cumsum(node_counts)])
    eptr = np.concatenate([[0], np.cumsum(edge_counts)])
    for i in range(num_graphs):
        tok_ref[i, 0] = np.asarray(graph_token[0])
        msk_ref[i, 0] = True
        ns, nen = int(nptr[i]), int(nptr[i + 1])
        tok_ref[i, 1:1 + (nen - ns)] = Xv_proj_ref[ns:nen]
        msk_ref[i, 1:1 + (nen - ns)] = True
        es, een = int(eptr[i]), int(eptr[i + 1])
        off = 1 + max_node
        tok_ref[i, off:off + (een - es)] = Xe_proj_ref[es:een]
        msk_ref[i, off:off + (een - es)] = True

    assert tokens.shape == (num_graphs, seq_len, hidden_dim)
    assert attn_mask.shape == (num_graphs, seq_len)
    assert attn_mask.dtype == jnp.bool_
    assert np.allclose(np.asarray(tokens), tok_ref, atol=1e-4), "token mismatch"
    assert np.array_equal(np.asarray(attn_mask), msk_ref), "mask mismatch"
    print("KERNEL_OK")
</pallas_src>

<mosaic_0001>
module attributes {stable_mosaic.version = 11 : i64} {
  func.func @_tokenize_kernel(%arg0: i32, %arg1: memref<1x32xf32, #tpu.memory_space<vmem>>, %arg2: memref<21x32xf32, #tpu.memory_space<vmem>>, %arg3: memref<19x32xf32, #tpu.memory_space<vmem>>, %arg4: memref<16x21xf32, #tpu.memory_space<vmem>>, %arg5: memref<32x19xf32, #tpu.memory_space<vmem>>, %arg6: memref<2x18x32xf32, #tpu.memory_space<vmem>>) attributes {dimension_semantics = [#tpu.dimension_semantics<parallel>], iteration_bounds = array<i64: 1>, scalar_prefetch = 0 : i64, scratch_operands = 0 : i64, tpu.core_type = #tpu.core_type<tc>, window_params = [{pipeline_mode = #tpu.pipeline_mode<synchronous>, transform_indices = @transform_0, window_bounds = array<i64: 1, 32>}, {pipeline_mode = #tpu.pipeline_mode<synchronous>, transform_indices = @transform_1, window_bounds = array<i64: 21, 32>}, {pipeline_mode = #tpu.pipeline_mode<synchronous>, transform_indices = @transform_2, window_bounds = array<i64: 19, 32>}, {transform_indices = @transform_3, window_bounds = array<i64: 16, 21>}, {transform_indices = @transform_4, window_bounds = array<i64: 32, 19>}, {transform_indices = @transform_5, window_bounds = array<i64: 2, 18, 32>}]} {
    %c0 = arith.constant 0 : index
    %c0_0 = arith.constant 0 : index
    %0 = vector.load %arg4[%c0, %c0_0] : memref<16x21xf32, #tpu.memory_space<vmem>>, vector<16x21xf32>
    %c0_1 = arith.constant 0 : index
    %c0_2 = arith.constant 0 : index
    %1 = vector.load %arg2[%c0_1, %c0_2] : memref<21x32xf32, #tpu.memory_space<vmem>>, vector<21x32xf32>
    %cst = arith.constant dense<0.000000e+00> : vector<16x32xf32>
    %2 = tpu.matmul %0, %1, %cst {dimension_numbers = #tpu.dot_dimension_numbers<[1], [0], [0], [1], [0, 0, 1, 1], [], []>} : vector<16x21xf32>, vector<21x32xf32>, vector<16x32xf32> -> vector<16x32xf32>
    %c0_3 = arith.constant 0 : index
    %c0_4 = arith.constant 0 : index
    %3 = vector.load %arg5[%c0_3, %c0_4] : memref<32x19xf32, #tpu.memory_space<vmem>>, vector<32x19xf32>
    %c0_5 = arith.constant 0 : index
    %c0_6 = arith.constant 0 : index
    %4 = vector.load %arg3[%c0_5, %c0_6] : memref<19x32xf32, #tpu.memory_space<vmem>>, vector<19x32xf32>
    %cst_7 = arith.constant dense<0.000000e+00> : vector<32x32xf32>
    %5 = tpu.matmul %3, %4, %cst_7 {dimension_numbers = #tpu.dot_dimension_numbers<[1], [0], [0], [1], [0, 0, 1, 1], [], []>} : vector<32x19xf32>, vector<19x32xf32>, vector<32x32xf32> -> vector<32x32xf32>
    %c0_8 = arith.constant 0 : index
    %c0_9 = arith.constant 0 : index
    %6 = vector.load %arg1[%c0_8, %c0_9] : memref<1x32xf32, #tpu.memory_space<vmem>>, vector<1x32xf32>
    %c0_10 = arith.constant 0 : index
    %c0_11 = arith.constant 0 : index
    %c0_12 = arith.constant 0 : index
    %7 = vector.load %arg6[%c0_10, %c0_11, %c0_12] : memref<2x18x32xf32, #tpu.memory_space<vmem>>, vector<1x1x32xf32>
    %8 = vector.shape_cast %7 : vector<1x1x32xf32> to vector<1x32xf32>
    %9 = vector.shape_cast %6 : vector<1x32xf32> to vector<1x1x32xf32>
    tpu.vector_store %arg6[%c0_10, %c0_11, %c0_12], %9 {strides = array<i32>} : memref<2x18x32xf32, #tpu.memory_space<vmem>>, vector<1x1x32xf32>,
    %10 = vector.extract_strided_slice %2 {offsets = [0, 0], sizes = [7, 32], strides = [1, 1]} : vector<16x32xf32> to vector<7x32xf32>
    %c0_13 = arith.constant 0 : index
    %c1 = arith.constant 1 : index
    %c0_14 = arith.constant 0 : index
    %11 = vector.load %arg6[%c0_13, %c1, %c0_14] : memref<2x18x32xf32, #tpu.memory_space<vmem>>, vector<1x7x32xf32>
    %12 = vector.shape_cast %11 : vector<1x7x32xf32> to vector<7x32xf32>
    %13 = vector.shape_cast %10 : vector<7x32xf32> to vector<1x7x32xf32>
    tpu.vector_store %arg6[%c0_13, %c1, %c0_14], %13 {strides = array<i32>} : memref<2x18x32xf32, #tpu.memory_space<vmem>>, vector<1x7x32xf32>,
    %14 = vector.extract_strided_slice %5 {offsets = [0, 0], sizes = [10, 32], strides = [1, 1]} : vector<32x32xf32> to vector<10x32xf32>
    %c0_15 = arith.constant 0 : index
    %c8 = arith.constant 8 : index
    %c0_16 = arith.constant 0 : index
    %15 = vector.load %arg6[%c0_15, %c8, %c0_16] : memref<2x18x32xf32, #tpu.memory_space<vmem>>, vector<1x10x32xf32>
    %16 = vector.shape_cast %15 : vector<1x10x32xf32> to vector<10x32xf32>
    %17 = vector.shape_cast %14 : vector<10x32xf32> to vector<1x10x32xf32>
    tpu.vector_store %arg6[%c0_15, %c8, %c0_16], %17 {strides = array<i32>} : memref<2x18x32xf32, #tpu.memory_space<vmem>>, vector<1x10x32xf32>,
    %c1_17 = arith.constant 1 : index
    %c0_18 = arith.constant 0 : index
    %c0_19 = arith.constant 0 : index
    %18 = vector.load %arg6[%c1_17, %c0_18, %c0_19] : memref<2x18x32xf32, #tpu.memory_space<vmem>>, vector<1x1x32xf32>
    %19 = vector.shape_cast %18 : vector<1x1x32xf32> to vector<1x32xf32>
    %20 = vector.shape_cast %6 : vector<1x32xf32> to vector<1x1x32xf32>
    tpu.vector_store %arg6[%c1_17, %c0_18, %c0_19], %20 {strides = array<i32>} : memref<2x18x32xf32, #tpu.memory_space<vmem>>, vector<1x1x32xf32>,
    %21 = vector.extract_strided_slice %2 {offsets = [8, 0], sizes = [7, 32], strides = [1, 1]} : vector<16x32xf32> to vector<7x32xf32>
    %c1_20 = arith.constant 1 : index
    %c1_21 = arith.constant 1 : index
    %c0_22 = arith.constant 0 : index
    %22 = vector.load %arg6[%c1_20, %c1_21, %c0_22] : memref<2x18x32xf32, #tpu.memory_space<vmem>>, vector<1x7x32xf32>
    %23 = vector.shape_cast %22 : vector<1x7x32xf32> to vector<7x32xf32>
    %24 = vector.shape_cast %21 : vector<7x32xf32> to vector<1x7x32xf32>
    tpu.vector_store %arg6[%c1_20, %c1_21, %c0_22], %24 {strides = array<i32>} : memref<2x18x32xf32, #tpu.memory_space<vmem>>, vector<1x7x32xf32>,
    %25 = vector.extract_strided_slice %5 {offsets = [16, 0], sizes = [10, 32], strides = [1, 1]} : vector<32x32xf32> to vector<10x32xf32>
    %c1_23 = arith.constant 1 : index
    %c8_24 = arith.constant 8 : index
    %c0_25 = arith.constant 0 : index
    %26 = vector.load %arg6[%c1_23, %c8_24, %c0_25] : memref<2x18x32xf32, #tpu.memory_space<vmem>>, vector<1x10x32xf32>
    %27 = vector.shape_cast %26 : vector<1x10x32xf32> to vector<10x32xf32>
    %28 = vector.shape_cast %25 : vector<10x32xf32> to vector<1x10x32xf32>
    tpu.vector_store %arg6[%c1_23, %c8_24, %c0_25], %28 {strides = array<i32>} : memref<2x18x32xf32, #tpu.memory_space<vmem>>, vector<1x10x32xf32>,
    return
  }
  func.func @transform_0(%arg0: i32) -> (i32, i32) {
    %c0_i32 = arith.constant 0 : i32
    %c0_i32_0 = arith.constant 0 : i32
    %c0_i32_1 = arith.constant 0 : i32
    return %c0_i32, %c0_i32_0 : i32, i32
  }
  func.func @transform_1(%arg0: i32) -> (i32, i32) {
    %c0_i32 = arith.constant 0 : i32
    %c0_i32_0 = arith.constant 0 : i32
    %c0_i32_1 = arith.constant 0 : i32
    return %c0_i32, %c0_i32_0 : i32, i32
  }
  func.func @transform_2(%arg0: i32) -> (i32, i32) {
    %c0_i32 = arith.constant 0 : i32
    %c0_i32_0 = arith.constant 0 : i32
    %c0_i32_1 = arith.constant 0 : i32
    return %c0_i32, %c0_i32_0 : i32, i32
  }
  func.func @transform_3(%arg0: i32) -> (i32, i32) {
    %c0_i32 = arith.constant 0 : i32
    %c0_i32_0 = arith.constant 0 : i32
    return %arg0, %c0_i32 : i32, i32
  }
  func.func @transform_4(%arg0: i32) -> (i32, i32) {
    %c0_i32 = arith.constant 0 : i32
    %c0_i32_0 = arith.constant 0 : i32
    return %arg0, %c0_i32 : i32, i32
  }
  func.func @transform_5(%arg0: i32) -> (i32, i32, i32) {
    %c0_i32 = arith.constant 0 : i32
    %c0_i32_0 = arith.constant 0 : i32
    %c0_i32_1 = arith.constant 0 : i32
    return %arg0, %c0_i32, %c0_i32_0 : i32, i32, i32
  }
}

</mosaic_0001>

<llo_original>
// kernel: tpu_custom_call.1
$region0: #{tpu_custom_call.1}
  #allocation0 [shape = 'u32[]', space=smem, size = 0x4, offset = 0x4, fixed_abs, tag = 'smem constant byte address 0x4 - core index']
  #allocation1 [shape = 'u32[144,128]{1,0:T(1,128)}', space=vmem, size = 0x12000, scoped, tag = 'internal scratch']
  %s0 = inlined_call_operand.vmem [shape: f32[1,32], index: 0, kind: input, shape index: {}]
  %s1 = inlined_call_operand.vmem [shape: f32[21,32], index: 1, kind: input, shape index: {}]
  %s2 = inlined_call_operand.vmem [shape: f32[19,32], index: 2, kind: input, shape index: {}]
  %s3 = inlined_call_operand.hbm [shape: f32[16,21], index: 3, kind: input, shape index: {}]
  %s4 = inlined_call_operand.vmem [shape: f32[32,19], index: 4, kind: input, shape index: {}]
  %s5 = inlined_call_operand.vmem [shape: f32[2,18,32], index: 5, kind: output, shape index: {}]
  %s6 = sld [smem:[#allocation0]]
  $region34: #{tpu_custom_call.1} parent=0
    _
  %s8 = ssub.s32 1, %s6
  %s9 = scalar_select 0, %s8, %s6
  $region1: #{tpu_custom_call.1} parent=0
    #allocation2 [shape = 'u8[8192]{0}', space=vmem, size = 0x2000, scoped, tag = 'input window, operand 3, single buffered']
    #allocation3 [shape = 's32[1]{0}', space=sflag, size = 0x4, scoped, tag = 'scoped memory for tpu_custom_call.1']
    %10 = vsyncpa [#allocation3], 0
    // Predicated region
    $region2: #{tpu_custom_call.1} parent=1 // pred_check
      _
    $region3: #{tpu_custom_call.1} parent=1 // pred_check_branch
      %12 = sbr.rel (0) target = $region5
    $region4: #{tpu_custom_call.1} parent=1 // pred_region
      _
    $region5: #{tpu_custom_call.1} parent=1 // pred_fallthru
      _
    // Predicated region
    $region6: #{tpu_custom_call.1} parent=1 // pred_check
      _
    $region7: #{tpu_custom_call.1} parent=1 // pred_check_branch
      %14 = sbr.rel (0) target = $region9
    $region8: #{tpu_custom_call.1} parent=1 // pred_region
      _
    $region9: #{tpu_custom_call.1} parent=1 // pred_fallthru
      _
    // Predicated region
    $region10: #{tpu_custom_call.1} parent=1 // pred_check
      _
    $region11: #{tpu_custom_call.1} parent=1 // pred_check_branch
      %16 = sbr.rel (0) target = $region13
    $region12: #{tpu_custom_call.1} parent=1 // pred_region
      _
    $region13: #{tpu_custom_call.1} parent=1 // pred_fallthru
      _
    // Predicated region
    $region14: #{tpu_custom_call.1} parent=1 // pred_check
      _
    $region15: #{tpu_custom_call.1} parent=1 // pred_check_branch
      %18 = sbr.rel (0) target = $region17
    $region16: #{tpu_custom_call.1} parent=1 // pred_region
      %s20 = ssub.s32 256, 256
      %21 = vsyncadd [#allocation3], %s20
      %s22 = sshll.u32 [#allocation2], 4
      %s23 = int_to_ptr.vmem [resolvable:$true] %s22
      %28 = dma.hbm_to_vmem [thread:$0]  %s3, 256, %s23, [#allocation3], 128, 128, 8
    $region17: #{tpu_custom_call.1} parent=1 // pred_fallthru
      _
    // Predicated region
    $region18: #{tpu_custom_call.1} parent=1 // pred_check
      _
    $region19: #{tpu_custom_call.1} parent=1 // pred_check_branch
      %30 = sbr.rel (0) target = $region21
    $region20: #{tpu_custom_call.1} parent=1 // pred_region
      _
    $region21: #{tpu_custom_call.1} parent=1 // pred_fallthru
      _
    // Predicated region
    $region22: #{tpu_custom_call.1} parent=1 // pred_check
      _
    $region23: #{tpu_custom_call.1} parent=1 // pred_check_branch
      %32 = sbr.rel (0) target = $region25
    $region24: #{tpu_custom_call.1} parent=1 // pred_region
      %33 = dma.done [#allocation3], 256
    $region25: #{tpu_custom_call.1} parent=1 // pred_fallthru
      _
    %v34 = vld [vmem:[#allocation2] sm:$0xff]
    %v35 = vld [vmem:[#allocation2 + $0x8] sm:$0xff]
    %v36 = vld [vmem:[%s1] sm:$0xff]
    %v37 = vld [vmem:[%s1 + $0x8] sm:$0xff]
    %v38 = vld [vmem:[%s1 + $0x10] sm:$0x1f]
    %vm39 = vcmask 171008
    %v41 = vsel %vm39, %v34, 0
    %v44 = vsel %vm39, %v35, 0
    %vm46 = vcmask 1044480
    %v48 = vsel %vm46, %v38, 0
    %50 = vmatprep.subr.mxu0 0.0
    %51 = vmatpush1.msra.mxu0 0.0
    %52 = vmatprep.subr.mxu0 0.0
    %53 = vmatpush1.msra.mxu0 0.0
    %54 = vmatprep.subr.mxu0 0.0
    %55 = vmatpush1.msra.mxu0 0.0
    %56 = vmatprep.subr.mxu0 0.0
    %57 = vmatpush1.msra.mxu0 0.0
    %58 = vmatprep.subr.mxu0 0.0
    %59 = vmatpush1.msra.mxu0 0.0
    %60 = vmatprep.subr.mxu0 0.0
    %61 = vmatpush1.msra.mxu0 0.0
    %62 = vmatprep.subr.mxu0 0.0
    %63 = vmatpush1.msra.mxu0 0.0
    %64 = vmatprep.subr.mxu0 0.0
    %65 = vmatpush1.msra.mxu0 0.0
    %66 = vmatprep.subr.mxu0 0.0
    %67 = vmatpush1.msra.mxu0 0.0
    %68 = vmatprep.subr.mxu0 0.0
    %69 = vmatpush1.msra.mxu0 0.0
    %70 = vmatprep.subr.mxu0 0.0
    %71 = vmatpush1.msra.mxu0 0.0
    %72 = vmatprep.subr.mxu0 0.0
    %73 = vmatpush1.msra.mxu0 0.0
    %74 = vmatprep.subr.mxu0 0.0
    %75 = vmatpush1.msra.mxu0 0.0
    %76 = vmatprep.subr.mxu0 0.0
    %77 = vmatpush1.msra.mxu0 %v48
    %78 = vmatprep.subr.mxu0 0.0
    %79 = vmatpush1.msra.mxu0 %v37
    %80 = vmatprep.subr.mxu0 0.0
    %81 = vmatpush1.msra.mxu0 %v36
    %82 = vmatprep.subr.mxu0 0.0
    %83 = vmatpush2.msra.mxu0 0.0
    %84 = vmatprep.subr.mxu0 0.0
    %85 = vmatpush2.msra.mxu0 0.0
    %86 = vmatprep.subr.mxu0 0.0
    %87 = vmatpush2.msra.mxu0 0.0
    %88 = vmatprep.subr.mxu0 0.0
    %89 = vmatpush2.msra.mxu0 0.0
    %90 = vmatprep.subr.mxu0 0.0
    %91 = vmatpush2.msra.mxu0 0.0
    %92 = vmatprep.subr.mxu0 0.0
    %93 = vmatpush2.msra.mxu0 0.0
    %94 = vmatprep.subr.mxu0 0.0
    %95 = vmatpush2.msra.mxu0 0.0
    %96 = vmatprep.subr.mxu0 0.0
    %97 = vmatpush2.msra.mxu0 0.0
    %98 = vmatprep.subr.mxu0 0.0
    %99 = vmatpush2.msra.mxu0 0.0
    %100 = vmatprep.subr.mxu0 0.0
    %101 = vmatpush2.msra.mxu0 0.0
    %102 = vmatprep.subr.mxu0 0.0
    %103 = vmatpush2.msra.mxu0 0.0
    %104 = vmatprep.subr.mxu0 0.0
    %105 = vmatpush2.msra.mxu0 0.0
    %106 = vmatprep.subr.mxu0 0.0
    %107 = vmatpush2.msra.mxu0 0.0
    %108 = vmatprep.subr.mxu0 0.0
    %109 = vmatpush2.msra.mxu0 0.0
    %110 = vmatprep.subr.mxu0 0.0
    %111 = vmatpush2.msra.mxu0 0.0
    %112 = vmatprep.subr.mxu0 0.0
    %113 = vmatpush2.msra.mxu0 0.0
    %114 = vmatprep.mubr.f32.mxu0 0.0
    %115 = vmatmul.mubr.f32.gmra.mxu0 %v41
    %v116 = vpop.f32.mrf.mxu0
    %v117 = vadd.f32 0.0, %v116
    %v118 = vpop.f32.mrf.mxu0
    %119 = vmatprep.mubr.f32.mxu0 0.0
    %120 = vmatmul.mubr.f32.gmra.mxu0 %v44
    %v121 = vpop.f32.mrf.mxu0
    %v122 = vadd.f32 0.0, %v121
    %v123 = vpop.f32.mrf.mxu0
    %124 = vdwg.mxu0
    %v125 = vld [vmem:[%s4] sm:$0xff]
    %v126 = vld [vmem:[%s4 + $0x8] sm:$0xff]
    %v127 = vld [vmem:[%s4 + $0x10] sm:$0xff]
    %v128 = vld [vmem:[%s4 + $0x18] sm:$0xff]
    %v129 = vld [vmem:[%s2] sm:$0xff]
    %v130 = vld [vmem:[%s2 + $0x8] sm:$0xff]
    %v131 = vld [vmem:[%s2 + $0x10] sm:$0x7]
    %vm132 = vcmask 154624
    %v134 = vsel %vm132, %v125, 0
    %v137 = vsel %vm132, %v126, 0
    %v140 = vsel %vm132, %v127, 0
    %v143 = vsel %vm132, %v128, 0
    %vm145 = vcmask 1042432
    %v147 = vsel %vm145, %v131, 0
    %149 = vmatprep.subr.mxu0 0.0
    %150 = vmatpush1.msra.mxu0 0.0
    %151 = vmatprep.subr.mxu0 0.0
    %152 = vmatpush1.msra.mxu0 0.0
    %153 = vmatprep.subr.mxu0 0.0
    %154 = vmatpush1.msra.mxu0 0.0
    %155 = vmatprep.subr.mxu0 0.0
    %156 = vmatpush1.msra.mxu0 0.0
    %157 = vmatprep.subr.mxu0 0.0
    %158 = vmatpush1.msra.mxu0 0.0
    %159 = vmatprep.subr.mxu0 0.0
    %160 = vmatpush1.msra.mxu0 0.0
    %161 = vmatprep.subr.mxu0 0.0
    %162 = vmatpush1.msra.mxu0 0.0
    %163 = vmatprep.subr.mxu0 0.0
    %164 = vmatpush1.msra.mxu0 0.0
    %165 = vmatprep.subr.mxu0 0.0
    %166 = vmatpush1.msra.mxu0 0.0
    %167 = vmatprep.subr.mxu0 0.0
    %168 = vmatpush1.msra.mxu0 0.0
    %169 = vmatprep.subr.mxu0 0.0
    %170 = vmatpush1.msra.mxu0 0.0
    %171 = vmatprep.subr.mxu0 0.0
    %172 = vmatpush1.msra.mxu0 0.0
    %173 = vmatprep.subr.mxu0 0.0
    %174 = vmatpush1.msra.mxu0 0.0
    %175 = vmatprep.subr.mxu0 0.0
    %176 = vmatpush1.msra.mxu0 %v147
    %177 = vmatprep.subr.mxu0 0.0
    %178 = vmatpush1.msra.mxu0 %v130
    %179 = vmatprep.subr.mxu0 0.0
    %180 = vmatpush1.msra.mxu0 %v129
    %181 = vmatprep.subr.mxu0 0.0
    %182 = vmatpush2.msra.mxu0 0.0
    %183 = vmatprep.subr.mxu0 0.0
    %184 = vmatpush2.msra.mxu0 0.0
    %185 = vmatprep.subr.mxu0 0.0
    %186 = vmatpush2.msra.mxu0 0.0
    %187 = vmatprep.subr.mxu0 0.0
    %188 = vmatpush2.msra.mxu0 0.0
    %189 = vmatprep.subr.mxu0 0.0
    %190 = vmatpush2.msra.mxu0 0.0
    %191 = vmatprep.subr.mxu0 0.0
    %192 = vmatpush2.msra.mxu0 0.0
    %193 = vmatprep.subr.mxu0 0.0
    %194 = vmatpush2.msra.mxu0 0.0
    %195 = vmatprep.subr.mxu0 0.0
    %196 = vmatpush2.msra.mxu0 0.0
    %197 = vmatprep.subr.mxu0 0.0
    %198 = vmatpush2.msra.mxu0 0.0
    %199 = vmatprep.subr.mxu0 0.0
    %200 = vmatpush2.msra.mxu0 0.0
    %201 = vmatprep.subr.mxu0 0.0
    %202 = vmatpush2.msra.mxu0 0.0
    %203 = vmatprep.subr.mxu0 0.0
    %204 = vmatpush2.msra.mxu0 0.0
    %205 = vmatprep.subr.mxu0 0.0
    %206 = vmatpush2.msra.mxu0 0.0
    %207 = vmatprep.subr.mxu0 0.0
    %208 = vmatpush2.msra.mxu0 0.0
    %209 = vmatprep.subr.mxu0 0.0
    %210 = vmatpush2.msra.mxu0 0.0
    %211 = vmatprep.subr.mxu0 0.0
    %212 = vmatpush2.msra.mxu0 0.0
    %213 = vmatprep.mubr.f32.mxu0 0.0
    %214 = vmatmul.mubr.f32.gmra.mxu0 %v134
    %v215 = vpop.f32.mrf.mxu0
    %v216 = vadd.f32 0.0, %v215
    %v217 = vpop.f32.mrf.mxu0
    %218 = vmatprep.mubr.f32.mxu0 0.0
    %219 = vmatmul.mubr.f32.gmra.mxu0 %v137
    %v220 = vpop.f32.mrf.mxu0
    %v221 = vadd.f32 0.0, %v220
    %v222 = vpop.f32.mrf.mxu0
    %223 = vmatprep.mubr.f32.mxu0 0.0
    %224 = vmatmul.mubr.f32.gmra.mxu0 %v140
    %v225 = vpop.f32.mrf.mxu0
    %v226 = vadd.f32 0.0, %v225
    %v227 = vpop.f32.mrf.mxu0
    %228 = vmatprep.mubr.f32.mxu0 0.0
    %229 = vmatmul.mubr.f32.gmra.mxu0 %v143
    %v230 = vpop.f32.mrf.mxu0
    %v231 = vadd.f32 0.0, %v230
    %v232 = vpop.f32.mrf.mxu0
    %233 = vdwg.mxu0
    %v234 = vld [vmem:[%s0] sm:$0x1]
    %vm235 = vcmask 253952
    %236 = vst.msk [vmem:[%s5] sm:$0x1] %vm235, %v234
    %vm237 = vcmask 260096
    %238 = vst.msk [vmem:[%s5 + $0x1] sm:$0x7f] %vm237, %v117
    %vm239 = vcmask 261120
    %240 = vst.msk [vmem:[%s5 + $0x8] sm:$0xff] %vm239, %v216
    %vm241 = vcmask 254976
    %242 = vst.msk [vmem:[%s5 + $0x10] sm:$0x3] %vm241, %v221
    %s243 = scalar_lea.vmem %s5, 24
    %244 = vst.msk [vmem:[%s243] sm:$0x1] %vm235, %v234
    %245 = vst.msk [vmem:[%s243 + $0x1] sm:$0x7f] %vm237, %v122
    %246 = vst.msk [vmem:[%s243 + $0x8] sm:$0xff] %vm239, %v226
    %247 = vst.msk [vmem:[%s243 + $0x10] sm:$0x3] %vm241, %v231
    // Predicated region
    $region26: #{tpu_custom_call.1} parent=1 // pred_check
      _
    $region27: #{tpu_custom_call.1} parent=1 // pred_check_branch
      %249 = sbr.rel (0) target = $region29
    $region28: #{tpu_custom_call.1} parent=1 // pred_region
      _
    $region29: #{tpu_custom_call.1} parent=1 // pred_fallthru
      _
    // Predicated region
    $region30: #{tpu_custom_call.1} parent=1 // pred_check
      _
    $region31: #{tpu_custom_call.1} parent=1 // pred_check_branch
      %251 = sbr.rel (0) target = $region33
    $region32: #{tpu_custom_call.1} parent=1 // pred_region
      _
    $region33: #{tpu_custom_call.1} parent=1 // pred_fallthru
      _
    %252 = vsyncpa [#allocation3], 1

</llo_original>
